<compile_context>
chip_gen: v5e
topology: v5e:2x2
jax: 0.10.0
libtpu: 0.0.40
codegen_flags: <defaults>
</compile_context>

<pallas_src>
import jax
import jax.numpy as jnp
from jax.experimental import pallas as pl
from jax.experimental.pallas import tpu as pltpu


def _fake_siglip_fill_kernel(w_ref, slab_ref):
    # w_ref:    SMEM, shape (1,)            -- the single learnable scalar
    # slab_ref: VMEM, shape (rows, 128)     -- lane-dense fill target
    slab_ref[...] = jnp.full(slab_ref.shape, w_ref[0], dtype=slab_ref.dtype)


def fake_siglip_forward(w, pixel_values=None, labels=None):
    """JAX/Pallas equivalent of FakeSiglip.forward. Returns logits of shape (bs, 2)."""
    bs = pixel_values.shape[0] if (pixel_values is not None and pixel_values.ndim == 4) else 1
    n = bs * 2
    rows = pl.cdiv(n, 128)  # lane-dense slab: last dim = 128 => unmasked full-width stores
    out_dtype = w.dtype
    itemsize = jnp.dtype(out_dtype).itemsize

    slab = pl.pallas_call(
        _fake_siglip_fill_kernel,
        out_shape=jax.ShapeDtypeStruct((rows, 128), out_dtype),
        in_specs=[pl.BlockSpec(memory_space=pltpu.MemorySpace.SMEM)],
        out_specs=pl.BlockSpec(memory_space=pltpu.MemorySpace.VMEM),
        cost_estimate=pl.CostEstimate(
            flops=0, transcendentals=0, bytes_accessed=n * itemsize
        ),
    )(w)

    # Slice the lane-dense slab back to the logical (bs, 2) logits.
    logits = slab.reshape(-1)[:n].reshape(bs, 2)
    return logits


def init_fake_siglip_params():
    # nn.Parameter(torch.zeros(1)) -> deterministic zero-initialized scalar.
    return jnp.zeros((1,), dtype=jnp.float32)


if __name__ == "__main__":
    key = jax.random.PRNGKey(0)
    # Small NCHW input consistent with an image model: (batch=2, channels=4, 16, 16)
    pixel_values = jax.random.normal(key, (2, 4, 16, 16), dtype=jnp.float32)

    w = init_fake_siglip_params()
    logits = fake_siglip_forward(w, pixel_values)
    logits = jax.block_until_ready(logits)

    # Reference check: logits must equal w broadcast to (bs, 2).
    expected = jnp.broadcast_to(w.reshape(1, 1), (pixel_values.shape[0], 2))
    assert logits.shape == (2, 2), logits.shape
    assert logits.dtype == w.dtype, logits.dtype
    assert jnp.allclose(logits, expected), (logits, expected)

    # Also exercise the non-4D fallback path (bs = 1).
    logits1 = jax.block_until_ready(
        fake_siglip_forward(w, jax.random.normal(key, (4, 16, 16), dtype=jnp.float32))
    )
    assert logits1.shape == (1, 2), logits1.shape
    assert jnp.allclose(logits1, jnp.broadcast_to(w.reshape(1, 1), (1, 2)))

    print("KERNEL_OK")
</pallas_src>

<mosaic_0001>
module attributes {stable_mosaic.version = 11 : i64} {
  func.func @_fake_siglip_fill_kernel(%arg0: memref<1xf32, #tpu.memory_space<smem>>, %arg1: memref<1x128xf32, #tpu.memory_space<vmem>>) attributes {dimension_semantics = [], scalar_prefetch = 0 : i64, scratch_operands = 0 : i64, tpu.core_type = #tpu.core_type<tc>} {
    %c0 = arith.constant 0 : index
    %0 = memref.load %arg0[%c0] : memref<1xf32, #tpu.memory_space<smem>>
    %1 = vector.broadcast %0 : f32 to vector<1x128xf32>
    %c0_0 = arith.constant 0 : index
    %c0_1 = arith.constant 0 : index
    %2 = vector.load %arg1[%c0_0, %c0_1] : memref<1x128xf32, #tpu.memory_space<vmem>>, vector<1x128xf32>
    tpu.vector_store %arg1[%c0_0, %c0_1], %1 {strides = array<i32>} : memref<1x128xf32, #tpu.memory_space<vmem>>, vector<1x128xf32>,
    return
  }
}

</mosaic_0001>

<llo_original>
// kernel: tpu_custom_call.1
$region0: #{tpu_custom_call.1}
  #allocation0 [shape = 'u32[]', space=smem, size = 0x4, offset = 0x4, fixed_abs, tag = 'smem constant byte address 0x4 - core index']
  #allocation1 [shape = 'u32[72,128]{1,0:T(1,128)}', space=vmem, size = 0x9000, scoped, tag = 'internal scratch']
  #allocation2 [shape = 'f32[1]{0:T(128)S(6)}', space=smem, size = 0x200, scoped, tag = 'scoped memory for tpu_custom_call.1']
  %s0 = inlined_call_operand.<no memory space> [shape: f32[1], index: 0, kind: input, shape index: {}]
  %s1 = inlined_call_operand.hbm [shape: f32[1,128], index: 1, kind: output, shape index: {}]
  %s2 = sld [smem:[#allocation0]]
  $region14: #{tpu_custom_call.1} parent=0
    _
  %s4 = ssub.s32 1, %s2
  %s5 = scalar_select 0, %s4, %s2
  %6 = sst [smem:[#allocation2]] %s0
  $region1: #{tpu_custom_call.1} parent=0
    #allocation3 [shape = 'u8[512]{0}', space=vmem, size = 0x400, scoped, tag = 'output window, operand 0, single buffered']
    #allocation4 [shape = 's32[1]{0}', space=sflag, size = 0x4, scoped, tag = 'scoped memory for tpu_custom_call.1']
    %7 = vsyncpa [#allocation4], 0
    // Predicated region
    $region2: #{tpu_custom_call.1} parent=1 // pred_check
      _
    $region3: #{tpu_custom_call.1} parent=1 // pred_check_branch
      %9 = sbr.rel (0) target = $region5
    $region4: #{tpu_custom_call.1} parent=1 // pred_region
      _
    $region5: #{tpu_custom_call.1} parent=1 // pred_fallthru
      _
    %s10 = sld [smem:[#allocation2]]
    %v11 = vstv %s10
    %12 = vst [vmem:[#allocation3] sm:$0x1] %v11
    // Predicated region
    $region6: #{tpu_custom_call.1} parent=1 // pred_check
      _
    $region7: #{tpu_custom_call.1} parent=1 // pred_check_branch
      %14 = sbr.rel (0) target = $region9
    $region8: #{tpu_custom_call.1} parent=1 // pred_region
      %16 = vsyncadd [#allocation4], 0
      %s18 = sshll.u32 [#allocation3], 4
      %s19 = int_to_ptr.vmem [resolvable:$true] %s18
      %s20 = sshll.u32 %s1, 4
      %s21 = int_to_ptr.hbm [resolvable:$true] %s20
      %23 = dma.vmem_to_hbm [thread:$0]  %s19, 16, %s21, [#allocation4]
    $region9: #{tpu_custom_call.1} parent=1 // pred_fallthru
      _
    // Predicated region
    $region10: #{tpu_custom_call.1} parent=1 // pred_check
      _
    $region11: #{tpu_custom_call.1} parent=1 // pred_check_branch
      %25 = sbr.rel (0) target = $region13
    $region12: #{tpu_custom_call.1} parent=1 // pred_region
      %27 = dma.done [#allocation4], 16
    $region13: #{tpu_custom_call.1} parent=1 // pred_fallthru
      _
    %28 = vsyncpa [#allocation4], 1

</llo_original>
